<compile_context>
chip_gen: v6e
topology: v6e:2x2x1
jax: 0.10.0
libtpu: 0.0.40
codegen_flags: <defaults>
</compile_context>

<pallas_src>
import math

import jax
import jax.numpy as jnp
from jax.experimental import pallas as pl
from jax.experimental.pallas import tpu as pltpu

VMEM_LIMIT_BYTES = 32 * 1024 * 1024   # > v5e's 16 MiB default scoped, < v7x's 64 MiB


def _round_up(x, m):
    return ((x + m - 1) // m) * m


# ----------------------------------------------------------------------------
# Generic lane-dense matmul kernels:  out(N, TM) = W^T(N, K) @ X^T(K, TM) [+ b]
# ----------------------------------------------------------------------------

def _mm_t_kernel(x_ref, w_ref, o_ref):
    o_ref[...] = jnp.dot(w_ref[...].astype(jnp.bfloat16),
                         x_ref[...].astype(jnp.bfloat16),
                         preferred_element_type=jnp.float32)


def _mm_t_bias_kernel(x_ref, w_ref, b_ref, o_ref):
    o_ref[...] = (jnp.dot(w_ref[...].astype(jnp.bfloat16),
                          x_ref[...].astype(jnp.bfloat16),
                          preferred_element_type=jnp.float32)
                  + b_ref[...])


def matmul_t(x2d, w, b=None, *, max_tm=512):
    """x2d:(M,K) @ w:(K,N) [+ b:(N,)] -> (M,N) float32.

    Internally computes (w.T @ x2d.T) so the big M axis sits on lanes and the
    stores are lane-dense; M is tiled over a "parallel" grid."""
    M, K = x2d.shape
    N = w.shape[1]
    tm = min(max_tm, _round_up(M, 128))
    Mp = _round_up(M, tm)
    xT = jnp.pad(x2d.T, ((0, 0), (0, Mp - M)))
    wT = w.T
    grid = (Mp // tm,)
    x_spec = pl.BlockSpec((K, tm), lambda i: (0, i))
    w_spec = pl.BlockSpec((N, K), lambda i: (0, 0))
    o_spec = pl.BlockSpec((N, tm), lambda i: (0, i))
    cparams = pltpu.CompilerParams(dimension_semantics=("parallel",),
                                   vmem_limit_bytes=VMEM_LIMIT_BYTES)
    if b is None:
        out_t = pl.pallas_call(
            _mm_t_kernel, grid=grid,
            in_specs=[x_spec, w_spec], out_specs=o_spec,
            out_shape=jax.ShapeDtypeStruct((N, Mp), jnp.float32),
            compiler_params=cparams,
        )(xT, wT)
    else:
        b_spec = pl.BlockSpec((N, 1), lambda i: (0, 0))
        out_t = pl.pallas_call(
            _mm_t_bias_kernel, grid=grid,
            in_specs=[x_spec, w_spec, b_spec], out_specs=o_spec,
            out_shape=jax.ShapeDtypeStruct((N, Mp), jnp.float32),
            compiler_params=cparams,
        )(xT, wT, b.reshape(N, 1))
    return out_t[:, :M].T


# ----------------------------------------------------------------------------
# Fused SparseKernelFT1d (A, B, C) spectral mixing:  one kernel per level
# ----------------------------------------------------------------------------

def _spectral_mix_kernel(x_ref, wab_ref, wc_ref, ab_ref, c_ref):
    # One retained Fourier mode per grid step.
    #   x  : (B, 4ck) = [dr | di | sr | si]
    #   wab: (4ck, 2ck)  complex A,B weights packed as a real block matrix
    #   wc : (2ck, 2ck)  complex C weights packed the same way
    # Outputs: ab = A(d)+B(s) spectrum [re|im], c = C(d) spectrum [re|im].
    x = x_ref[0].astype(jnp.bfloat16)
    two_ck = wc_ref.shape[1]
    ab_ref[0] = jnp.dot(x, wab_ref[0], preferred_element_type=jnp.float32)
    c_ref[0] = jnp.dot(x[:, :two_ck], wc_ref[0], preferred_element_type=jnp.float32)


def sparse_kernel_ft_fused(d, s, W_AB, W_C, modes):
    """Compute A(d) + B(s) and C(d) (SparseKernelFT1d x3) in one Pallas call."""
    B, N, c, k = d.shape
    ck = c * k
    Nf = N // 2 + 1
    limit = min(modes, Nf)

    # TODO(synk): rfft/irfft have no Pallas TPU lowering; done with XLA FFT.
    d_ft = jnp.fft.rfft(jnp.transpose(d.reshape(B, N, ck), (0, 2, 1)), axis=-1)[..., :limit]
    s_ft = jnp.fft.rfft(jnp.transpose(s.reshape(B, N, ck), (0, 2, 1)), axis=-1)[..., :limit]

    def mode_major(z):                       # (B, ck, limit) -> (limit, B, ck)
        return jnp.transpose(z, (2, 0, 1)).astype(jnp.float32)

    x_cat = jnp.concatenate(
        [mode_major(jnp.real(d_ft)), mode_major(jnp.imag(d_ft)),
         mode_major(jnp.real(s_ft)), mode_major(jnp.imag(s_ft))],
        axis=-1)                             # (limit, B, 4ck)

    ab_out, c_out = pl.pallas_call(
        _spectral_mix_kernel,
        grid=(limit,),
        in_specs=[pl.BlockSpec((1, B, 4 * ck), lambda m: (m, 0, 0)),
                  pl.BlockSpec((1, 4 * ck, 2 * ck), lambda m: (m, 0, 0)),
                  pl.BlockSpec((1, 2 * ck, 2 * ck), lambda m: (m, 0, 0))],
        out_specs=(pl.BlockSpec((1, B, 2 * ck), lambda m: (m, 0, 0)),
                   pl.BlockSpec((1, B, 2 * ck), lambda m: (m, 0, 0))),
        out_shape=(jax.ShapeDtypeStruct((limit, B, 2 * ck), jnp.float32),
                   jax.ShapeDtypeStruct((limit, B, 2 * ck), jnp.float32)),
        compiler_params=pltpu.CompilerParams(
            dimension_semantics=("parallel",),
            vmem_limit_bytes=VMEM_LIMIT_BYTES),
    )(x_cat, W_AB[:limit], W_C[:limit])

    def back(out):                           # (limit, B, 2ck) -> (B, N, c, k)
        z = out[..., :ck] + 1j * out[..., ck:]           # (limit, B, ck) complex
        z = jnp.transpose(z, (1, 2, 0))                  # (B, ck, limit)
        ft = jnp.zeros((B, ck, Nf), jnp.complex64).at[..., :limit].set(z)
        t = jnp.fft.irfft(ft, n=N, axis=-1)              # (B, ck, N)
        return jnp.transpose(t, (0, 2, 1)).reshape(B, N, c, k).astype(jnp.float32)

    return back(ab_out), back(c_out)


# ----------------------------------------------------------------------------
# MWT_CZ1d
# ----------------------------------------------------------------------------

def wavelet_transform(x, W_ds):
    """x: (B, N, c, k) -> (d, s), each (B, N//2, c, k).  Filters fused into one matmul."""
    B, N, c, k = x.shape
    xa = jnp.concatenate([x[:, ::2], x[:, 1::2]], axis=-1)   # (B, N//2, c, 2k)
    out = matmul_t(xa.reshape(-1, 2 * k), W_ds)              # (M, 2k) = [d | s]
    out = out.reshape(B, N // 2, c, 2 * k)
    return out[..., :k], out[..., k:]


def even_odd(x, W_eo, k):
    """x: (B, N, c, 2k) -> (B, 2N, c, k) with even/odd interleave (rc_e|rc_o fused)."""
    B, N, c, two_k = x.shape
    assert two_k == 2 * k
    out = matmul_t(x.reshape(-1, two_k), W_eo).reshape(B, N, c, 2 * k)
    xe, xo = out[..., :k], out[..., k:]
    return jnp.stack([xe, xo], axis=2).reshape(B, 2 * N, c, k)


def mwt_cz_forward(x, p, *, k, L, modes):
    B, N, c, _ = x.shape
    ns = math.floor(math.log2(N))
    nl = 2 ** math.ceil(math.log2(N))
    if nl > N:
        x = jnp.concatenate([x, x[:, :nl - N]], axis=1)

    Ud, Us = [], []
    for _ in range(ns - L):
        d, x = wavelet_transform(x, p["W_ds"])
        ab, cd = sparse_kernel_ft_fused(d, x, p["W_AB"], p["W_C"], modes)
        Ud.append(ab)          # A(d) + B(x)
        Us.append(cd)          # C(d)

    x = matmul_t(x.reshape(-1, k), p["T0_w"], p["T0_b"]).reshape(x.shape)

    for i in range(ns - 1 - L, -1, -1):
        x = x + Us[i]
        x = jnp.concatenate([x, Ud[i]], axis=-1)
        x = even_odd(x, p["W_eo"], k)
    return x[:, :N]


# ----------------------------------------------------------------------------
# MultiWaveletTransform forward
# ----------------------------------------------------------------------------

def multi_wavelet_transform_forward(queries, keys, values, attn_mask, params, *,
                                    c, k, L, nCZ, modes):
    B, Lq, H, E = queries.shape
    _, S, _, D = values.shape
    if Lq > S:
        zeros = jnp.zeros_like(queries[:, :Lq - S]).astype(jnp.float32)
        values = jnp.concatenate([values, zeros], axis=1)
        keys = jnp.concatenate([keys, zeros], axis=1)   # keys unused downstream
    else:
        values = values[:, :Lq]
        keys = keys[:, :Lq]

    V = matmul_t(values.reshape(B * Lq, H * D), params["Lk0_w"], params["Lk0_b"])
    V = V.reshape(B, Lq, c, k)
    for i in range(nCZ):
        V = mwt_cz_forward(V, params["cz"][i], k=k, L=L, modes=modes)
        if i < nCZ - 1:
            V = jax.nn.relu(V)
    V = matmul_t(V.reshape(B * Lq, c * k), params["Lk1_w"], params["Lk1_b"])
    return V.reshape(B, Lq, -1, D), None


# ----------------------------------------------------------------------------
# Deterministic parameter construction (shapes follow the torch __init__)
# ----------------------------------------------------------------------------

def build_spectral_weights(Awr, Awi, Bwr, Bwi, Cwr, Cwi):
    """Pack A/B/C complex weights (ck, ck, modes) into real block matrices."""
    def mm(w):                               # (ck, ck, modes) -> (modes, ck, ck)
        return jnp.transpose(w, (2, 0, 1))
    Awr, Awi, Bwr, Bwi, Cwr, Cwi = map(mm, (Awr, Awi, Bwr, Bwi, Cwr, Cwi))
    # [xr | xi] @ [[wr, wi], [-wi, wr]] = [xr@wr - xi@wi | xr@wi + xi@wr]
    W_A = jnp.concatenate([jnp.concatenate([Awr, Awi], axis=2),
                           jnp.concatenate([-Awi, Awr], axis=2)], axis=1)
    W_B = jnp.concatenate([jnp.concatenate([Bwr, Bwi], axis=2),
                           jnp.concatenate([-Bwi, Bwr], axis=2)], axis=1)
    W_C = jnp.concatenate([jnp.concatenate([Cwr, Cwi], axis=2),
                           jnp.concatenate([-Cwi, Cwr], axis=2)], axis=1)
    W_AB = jnp.concatenate([W_A, W_B], axis=1)        # (modes, 4ck, 2ck)
    return W_AB.astype(jnp.bfloat16), W_C.astype(jnp.bfloat16)


def init_params(key, *, ich, c, k, modes, nCZ):
    ck = c * k
    keys = jax.random.split(key, 4 + nCZ)

    def lin(kk_, fan_in, fan_out):
        kw, kb = jax.random.split(kk_)
        lim = 1.0 / math.sqrt(fan_in)
        w = jax.random.uniform(kw, (fan_in, fan_out), jnp.float32, -lim, lim)
        b = jax.random.uniform(kb, (fan_out,), jnp.float32, -lim, lim)
        return w, b

    Lk0_w, Lk0_b = lin(keys[0], ich, ck)
    Lk1_w, Lk1_b = lin(keys[1], ck, ich)

    cz_params = []
    for i in range(nCZ):
        kz = jax.random.split(keys[4 + i], 12)
        # TODO(synk): get_filter('legendre', k) (Gauss-Legendre quadrature) is not
        # ported; filter buffers are deterministic random stand-ins of the correct
        # shapes ((2k, k) each), fused column-wise into single (2k, 2k) matrices.
        scale_f = 1.0 / math.sqrt(2 * k)
        ec_d = jax.random.normal(kz[0], (2 * k, k), jnp.float32) * scale_f
        ec_s = jax.random.normal(kz[1], (2 * k, k), jnp.float32) * scale_f
        rc_e = jax.random.normal(kz[2], (2 * k, k), jnp.float32) * scale_f
        rc_o = jax.random.normal(kz[3], (2 * k, k), jnp.float32) * scale_f
        W_ds = jnp.concatenate([ec_d, ec_s], axis=1)   # (2k, 2k): [ec_d | ec_s]
        W_eo = jnp.concatenate([rc_e, rc_o], axis=1)   # (2k, 2k): [rc_e | rc_o]

        T0_w, T0_b = lin(kz[4], k, k)

        # SparseKernelFT1d weights (A, B, C): scale * U[0,1) real & imag,
        # matching torch.rand(ck, ck, modes, dtype=cfloat) * scale.
        scale_w = 1.0 / (ck * ck)

        def cplx(kr_, ki_):
            wr = jax.random.uniform(kr_, (ck, ck, modes), jnp.float32) * scale_w
            wi = jax.random.uniform(ki_, (ck, ck, modes), jnp.float32) * scale_w
            return wr, wi

        Awr, Awi = cplx(kz[5], kz[6])
        Bwr, Bwi = cplx(kz[7], kz[8])
        Cwr, Cwi = cplx(kz[9], kz[10])
        W_AB, W_C = build_spectral_weights(Awr, Awi, Bwr, Bwi, Cwr, Cwi)

        cz_params.append(dict(W_ds=W_ds, W_eo=W_eo, T0_w=T0_w, T0_b=T0_b,
                              W_AB=W_AB, W_C=W_C))

    return dict(Lk0_w=Lk0_w, Lk0_b=Lk0_b, Lk1_w=Lk1_w, Lk1_b=Lk1_b, cz=cz_params)


# ----------------------------------------------------------------------------

if __name__ == "__main__":
    B, L_seq, S_seq, H, E = 2, 12, 12, 4, 8      # ich = H*E = 32
    c, k, modes, L_level, nCZ = 4, 4, 16, 0, 1

    key = jax.random.PRNGKey(0)
    kq, kk_, kv, kp = jax.random.split(key, 4)
    q = jax.random.normal(kq, (B, L_seq, H, E), jnp.float32)
    kx = jax.random.normal(kk_, (B, S_seq, H, E), jnp.float32)
    v = jax.random.normal(kv, (B, S_seq, H, E), jnp.float32)

    params = init_params(kp, ich=H * E, c=c, k=k, modes=modes, nCZ=nCZ)

    out, _ = multi_wavelet_transform_forward(
        q, kx, v, None, params, c=c, k=k, L=L_level, nCZ=nCZ, modes=modes)
    out = jax.block_until_ready(out)

    assert out.shape == (B, L_seq, H, E), out.shape
    assert bool(jnp.all(jnp.isfinite(out)))
    print("KERNEL_OK")
</pallas_src>

<mosaic_0001>
module attributes {stable_mosaic.version = 11 : i64} {
  func.func @_mm_t_bias_kernel(%arg0: i32, %arg1: memref<32x128xf32, #tpu.memory_space<vmem>>, %arg2: memref<16x32xf32, #tpu.memory_space<vmem>>, %arg3: memref<16x1xf32, #tpu.memory_space<vmem>>, %arg4: memref<16x128xf32, #tpu.memory_space<vmem>>) attributes {dimension_semantics = [#tpu.dimension_semantics<parallel>], iteration_bounds = array<i64: 1>, scalar_prefetch = 0 : i64, scratch_operands = 0 : i64, tpu.core_type = #tpu.core_type<tc>, window_params = [{transform_indices = @transform_0, window_bounds = array<i64: 32, 128>}, {pipeline_mode = #tpu.pipeline_mode<synchronous>, transform_indices = @transform_1, window_bounds = array<i64: 16, 32>}, {pipeline_mode = #tpu.pipeline_mode<synchronous>, transform_indices = @transform_2, window_bounds = array<i64: 16, 1>}, {transform_indices = @transform_3, window_bounds = array<i64: 16, 128>}]} {
    %c0 = arith.constant 0 : index
    %c0_0 = arith.constant 0 : index
    %0 = vector.load %arg2[%c0, %c0_0] : memref<16x32xf32, #tpu.memory_space<vmem>>, vector<16x32xf32>
    %1 = arith.truncf %0 : vector<16x32xf32> to vector<16x32xbf16>
    %c0_1 = arith.constant 0 : index
    %c0_2 = arith.constant 0 : index
    %2 = vector.load %arg1[%c0_1, %c0_2] : memref<32x128xf32, #tpu.memory_space<vmem>>, vector<32x128xf32>
    %3 = arith.truncf %2 : vector<32x128xf32> to vector<32x128xbf16>
    %cst = arith.constant dense<0.000000e+00> : vector<16x128xf32>
    %4 = tpu.matmul %1, %3, %cst {dimension_numbers = #tpu.dot_dimension_numbers<[1], [0], [0], [1], [0, 0, 1, 1], [], []>} : vector<16x32xbf16>, vector<32x128xbf16>, vector<16x128xf32> -> vector<16x128xf32>
    %c0_3 = arith.constant 0 : index
    %c0_4 = arith.constant 0 : index
    %5 = vector.load %arg3[%c0_3, %c0_4] : memref<16x1xf32, #tpu.memory_space<vmem>>, vector<16x1xf32>
    %6 = vector.broadcast %5 : vector<16x1xf32> to vector<16x128xf32>
    %7 = arith.addf %4, %6 : vector<16x128xf32>
    %c0_5 = arith.constant 0 : index
    %c0_6 = arith.constant 0 : index
    %8 = vector.load %arg4[%c0_5, %c0_6] : memref<16x128xf32, #tpu.memory_space<vmem>>, vector<16x128xf32>
    tpu.vector_store %arg4[%c0_5, %c0_6], %7 {strides = array<i32>} : memref<16x128xf32, #tpu.memory_space<vmem>>, vector<16x128xf32>,
    return
  }
  func.func @transform_0(%arg0: i32) -> (i32, i32) {
    %c0_i32 = arith.constant 0 : i32
    %c0_i32_0 = arith.constant 0 : i32
    return %c0_i32, %arg0 : i32, i32
  }
  func.func @transform_1(%arg0: i32) -> (i32, i32) {
    %c0_i32 = arith.constant 0 : i32
    %c0_i32_0 = arith.constant 0 : i32
    %c0_i32_1 = arith.constant 0 : i32
    return %c0_i32, %c0_i32_0 : i32, i32
  }
  func.func @transform_2(%arg0: i32) -> (i32, i32) {
    %c0_i32 = arith.constant 0 : i32
    %c0_i32_0 = arith.constant 0 : i32
    %c0_i32_1 = arith.constant 0 : i32
    return %c0_i32, %c0_i32_0 : i32, i32
  }
  func.func @transform_3(%arg0: i32) -> (i32, i32) {
    %c0_i32 = arith.constant 0 : i32
    %c0_i32_0 = arith.constant 0 : i32
    return %c0_i32, %arg0 : i32, i32
  }
}

</mosaic_0001>

<llo_original>
// kernel: tpu_custom_call.1
$region0: #{tpu_custom_call.1}
  #allocation0 [shape = 'u32[]', space=smem, size = 0x4, offset = 0x4, fixed_abs, tag = 'smem constant byte address 0x4 - core index']
  #allocation1 [shape = 'u32[144,128]{1,0:T(1,128)}', space=vmem, size = 0x12000, scoped, tag = 'internal scratch']
  %s0 = inlined_call_operand.hbm [shape: f32[32,128], index: 0, kind: input, shape index: {}]
  %s1 = inlined_call_operand.vmem [shape: f32[16,32], index: 1, kind: input, shape index: {}]
  %s2 = inlined_call_operand.vmem [shape: f32[16,1], index: 2, kind: input, shape index: {}]
  %s3 = inlined_call_operand.hbm [shape: f32[16,128], index: 3, kind: output, shape index: {}]
  %s4 = sld [smem:[#allocation0]]
  $region26: #{tpu_custom_call.1} parent=0
    _
  %s6 = ssub.s32 1, %s4
  %s7 = scalar_select 0, %s6, %s4
  $region1: #{tpu_custom_call.1} parent=0
    #allocation2 [shape = 'u8[16384]{0}', space=vmem, size = 0x4000, scoped, tag = 'input window, operand 0, single buffered']
    #allocation3 [shape = 's32[1]{0}', space=sflag, size = 0x4, scoped, tag = 'scoped memory for tpu_custom_call.1']
    #allocation4 [shape = 's32[1]{0}', space=sflag, size = 0x4, scoped, tag = 'scoped memory for tpu_custom_call.1']
    #allocation5 [shape = 'u8[8192]{0}', space=vmem, size = 0x2000, scoped, tag = 'output window, operand 0, single buffered']
    %8 = vsyncpa [#allocation3], 0
    %9 = vsyncpa [#allocation4], 0
    // Predicated region
    $region2: #{tpu_custom_call.1} parent=1 // pred_check
      _
    $region3: #{tpu_custom_call.1} parent=1 // pred_check_branch
      %11 = sbr.rel (0) target = $region5
    $region4: #{tpu_custom_call.1} parent=1 // pred_region
      %s13 = ssub.s32 512, 512
      %14 = vsyncadd [#allocation3], %s13
      %s15 = sshll.u32 [#allocation2], 4
      %s16 = int_to_ptr.vmem [resolvable:$true] %s15
      %21 = dma.hbm_to_vmem [thread:$0]  %s0, 512, %s16, [#allocation3], 128, 128, 8
    $region5: #{tpu_custom_call.1} parent=1 // pred_fallthru
      _
    // Predicated region
    $region6: #{tpu_custom_call.1} parent=1 // pred_check
      _
    $region7: #{tpu_custom_call.1} parent=1 // pred_check_branch
      %23 = sbr.rel (0) target = $region9
    $region8: #{tpu_custom_call.1} parent=1 // pred_region
      _
    $region9: #{tpu_custom_call.1} parent=1 // pred_fallthru
      _
    // Predicated region
    $region10: #{tpu_custom_call.1} parent=1 // pred_check
      _
    $region11: #{tpu_custom_call.1} parent=1 // pred_check_branch
      %25 = sbr.rel (0) target = $region13
    $region12: #{tpu_custom_call.1} parent=1 // pred_region
      _
    $region13: #{tpu_custom_call.1} parent=1 // pred_fallthru
      _
    // Predicated region
    $region14: #{tpu_custom_call.1} parent=1 // pred_check
      _
    $region15: #{tpu_custom_call.1} parent=1 // pred_check_branch
      %27 = sbr.rel (0) target = $region17
    $region16: #{tpu_custom_call.1} parent=1 // pred_region
      %28 = dma.done [#allocation3], 512
    $region17: #{tpu_custom_call.1} parent=1 // pred_fallthru
      _
    %v30 = vld [vmem:[%s1] sm:$0xff]
    %v31 = vld [vmem:[%s1 + $0x8] sm:$0xff]
    %v32 = vpack.c.bf16 %v31, %v30
    %v33 = vld [vmem:[#allocation2] sm:$0xff]
    %v34 = vld [vmem:[#allocation2 + $0x8] sm:$0xff]
    %v35 = vld [vmem:[#allocation2 + $0x10] sm:$0xff]
    %v36 = vld [vmem:[#allocation2 + $0x18] sm:$0xff]
    %v37 = vpack.c.bf16 %v34, %v33
    %v38 = vpack.c.bf16 %v36, %v35
    %v39 = vld [vmem:[%s2] sm:$0xff]
    %v40 = vld [vmem:[%s2 + $0x8] sm:$0xff]
    %42 = vset.pattern.permute.xlu0 0
    %43 = vperm.xlu0 %42, %v39
    %v44 = vpop.permute.xlu0 %43
    %47 = vset.pattern.permute.xlu0 0
    %48 = vperm.xlu0 %47, %v40
    %v49 = vpop.permute.xlu0 %48
    %vm51 = vcmask 261120
    %v53 = vsel %vm51, %v32, 0
    %55 = vmatprep.subr.bf16.mxu0 0
    %56 = vmatpush1.bf16.msra.mxu0 0
    %57 = vmatprep.subr.bf16.mxu0 0
    %58 = vmatpush1.bf16.msra.mxu0 0
    %59 = vmatprep.subr.bf16.mxu0 0
    %60 = vmatpush1.bf16.msra.mxu0 0
    %61 = vmatprep.subr.bf16.mxu0 0
    %62 = vmatpush1.bf16.msra.mxu0 0
    %63 = vmatprep.subr.bf16.mxu0 0
    %64 = vmatpush1.bf16.msra.mxu0 0
    %65 = vmatprep.subr.bf16.mxu0 0
    %66 = vmatpush1.bf16.msra.mxu0 0
    %67 = vmatprep.subr.bf16.mxu0 0
    %68 = vmatpush1.bf16.msra.mxu0 %v38
    %69 = vmatprep.subr.bf16.mxu0 0
    %70 = vmatpush1.bf16.msra.mxu0 %v37
    %71 = vmatprep.subr.bf16.mxu0 0
    %72 = vmatpush2.bf16.msra.mxu0 0
    %73 = vmatprep.subr.bf16.mxu0 0
    %74 = vmatpush2.bf16.msra.mxu0 0
    %75 = vmatprep.subr.bf16.mxu0 0
    %76 = vmatpush2.bf16.msra.mxu0 0
    %77 = vmatprep.subr.bf16.mxu0 0
    %78 = vmatpush2.bf16.msra.mxu0 0
    %79 = vmatprep.subr.bf16.mxu0 0
    %80 = vmatpush2.bf16.msra.mxu0 0
    %81 = vmatprep.subr.bf16.mxu0 0
    %82 = vmatpush2.bf16.msra.mxu0 0
    %83 = vmatprep.subr.bf16.mxu0 0
    %84 = vmatpush2.bf16.msra.mxu0 0
    %85 = vmatprep.subr.bf16.mxu0 0
    %86 = vmatpush2.bf16.msra.mxu0 0
    %87 = vmatprep.mubr.bf16.mxu0 0
    %88 = vmatmul.mubr.bf16.gmra.mxu0 %v53
    %v89 = vpop.f32.mrf.mxu0
    %v90 = vadd.f32 %v44, %v89
    %v91 = vpop.f32.mrf.mxu0
    %v92 = vpop.f32.mrf.mxu0
    %v93 = vadd.f32 %v49, %v92
    %v94 = vpop.f32.mrf.mxu0
    %95 = vdwg.mxu0
    %96 = vst [vmem:[#allocation5] sm:$0xff] %v90
    %97 = vst [vmem:[#allocation5 + $0x8] sm:$0xff] %v93
    // Predicated region
    $region18: #{tpu_custom_call.1} parent=1 // pred_check
      _
    $region19: #{tpu_custom_call.1} parent=1 // pred_check_branch
      %99 = sbr.rel (0) target = $region21
    $region20: #{tpu_custom_call.1} parent=1 // pred_region
      %s101 = ssub.s32 256, 256
      %102 = vsyncadd [#allocation4], %s101
      %s103 = sshll.u32 [#allocation5], 4
      %s104 = int_to_ptr.vmem [resolvable:$true] %s103
      %109 = dma.vmem_to_hbm [thread:$0]  %s104, 256, %s3, [#allocation4], 128, 128, 8
    $region21: #{tpu_custom_call.1} parent=1 // pred_fallthru
      _
    // Predicated region
    $region22: #{tpu_custom_call.1} parent=1 // pred_check
      _
    $region23: #{tpu_custom_call.1} parent=1 // pred_check_branch
      %111 = sbr.rel (0) target = $region25
    $region24: #{tpu_custom_call.1} parent=1 // pred_region
      %112 = dma.done [#allocation4], 256
    $region25: #{tpu_custom_call.1} parent=1 // pred_fallthru
      _
    %113 = vsyncpa [#allocation3], 1
    %114 = vsyncpa [#allocation4], 1

</llo_original>
